<compile_context>
chip_gen: v7x
topology: tpu7x:2x2x1
jax: 0.10.0
libtpu: 0.0.40
codegen_flags: <defaults>
</compile_context>

<pallas_src>
import functools

import jax
import jax.numpy as jnp
import numpy as np
from jax.experimental import pallas as pl
from jax.experimental.pallas import tpu as pltpu


def _round_up(x, m):
    return (x + m - 1) // m * m


@functools.lru_cache(maxsize=None)
def _vmem_limit_bytes():
    # Generation-aware scoped-VMEM limit: <= 3/4 of physical per-core VMEM
    # (v7x: 64 MiB -> 48 MiB; v5e/v6e: 128 MiB -> 96 MiB), never above 100 MiB.
    try:
        cap = pltpu.get_tpu_info().vmem_capacity_bytes
    except Exception:
        cap = 64 * 1024 * 1024
    return int(min(cap * 3 // 4, 100 * 1024 * 1024))


def _row_tile(M, tm):
    """Row tile: multiple of 8 sublanes, <= row count, and capped so the row
    grid keeps >= 2 steps (lets v7x shard rows across both TensorCores)."""
    tm_eff = max(8, min(_round_up(tm, 8), _round_up(M, 8)))
    if M > 8:
        tm_eff = min(tm_eff, _round_up(-(-M // 2), 8))
    return tm_eff


def _compiler_params():
    return pltpu.CompilerParams(
        dimension_semantics=("parallel",),
        vmem_limit_bytes=_vmem_limit_bytes())


def _fold_bias(b_in, b_fn, b_out, w_fn_res, w_out):
    # Exact f32 fold:  b_total = (b_in @ (W_fn + I) + b_fn) @ W_out + b_out
    return (b_in @ w_fn_res + b_fn) @ w_out + b_out


# --------------------------------------------------------------------------
# Path 1 (default): fn is Linear => whole block is affine => single matmul.
# --------------------------------------------------------------------------
def _affine_kernel(x_ref, w_ref, b_ref, o_ref):
    x = x_ref[...].astype(jnp.bfloat16)                       # in-kernel cast
    acc = jnp.dot(x, w_ref[...], preferred_element_type=jnp.float32)
    o_ref[...] = (acc + b_ref[...]).astype(o_ref.dtype)


@functools.partial(jax.jit, static_argnames=("tm",))
def project_in_out(x, w_in, b_in, w_fn, b_fn, w_out, b_out, *, tm=512):
    """x: [B, N, dim_outer] -> [B, N, dim_outer]; fn = Linear (affine collapse)."""
    B, N, Do = x.shape
    Di = w_in.shape[1]
    M = B * N

    w_fn_res = w_fn + jnp.eye(Di, dtype=w_fn.dtype)           # W_fn + I (f32)
    w_total = (w_in @ w_fn_res @ w_out).astype(jnp.bfloat16)  # [Do, Do]
    b_total = _fold_bias(b_in, b_fn, b_out, w_fn_res, w_out).reshape(1, Do)

    x2d = x.reshape(M, Do)                                    # view, no copy
    tm_eff = _row_tile(M, tm)
    grid = (pl.cdiv(M, tm_eff),)

    out2d = pl.pallas_call(
        _affine_kernel,
        out_shape=jax.ShapeDtypeStruct((M, Do), x.dtype),
        grid_spec=pltpu.PrefetchScalarGridSpec(
            num_scalar_prefetch=0,
            grid=grid,
            in_specs=[
                pl.BlockSpec((tm_eff, Do), lambda i: (i, 0)),  # x rows (f32)
                pl.BlockSpec((Do, Do), lambda i: (0, 0)),      # W_total (bf16)
                pl.BlockSpec((1, Do), lambda i: (0, 0)),       # b_total (f32)
            ],
            out_specs=pl.BlockSpec((tm_eff, Do), lambda i: (i, 0)),
        ),
        compiler_params=_compiler_params(),
    )(x2d, w_total, b_total)

    return out2d.reshape(B, N, Do)


# --------------------------------------------------------------------------
# Path 2: general ProjectInOut structure (3 matmuls, residual added in f32).
# Use this shape of kernel when fn is genuinely nonlinear.
# --------------------------------------------------------------------------
def _fused_kernel(x_ref, w_in_ref, w_fn_ref, w_out_ref, b_ref, o_ref):
    x = x_ref[...].astype(jnp.bfloat16)
    h = jnp.dot(x, w_in_ref[...], preferred_element_type=jnp.float32)   # x@W_in (b_in folded)
    y = jnp.dot(h.astype(jnp.bfloat16), w_fn_ref[...],
                preferred_element_type=jnp.float32) + h                 # fn + f32 residual
    out = jnp.dot(y.astype(jnp.bfloat16), w_out_ref[...],
                  preferred_element_type=jnp.float32) + b_ref[...]
    o_ref[...] = out.astype(o_ref.dtype)


@functools.partial(jax.jit, static_argnames=("tm",))
def project_in_out_fused(x, w_in, b_in, w_fn, b_fn, w_out, b_out, *, tm=512):
    B, N, Do = x.shape
    Di = w_in.shape[1]
    M = B * N

    w_fn_res = w_fn + jnp.eye(Di, dtype=w_fn.dtype)
    b_total = _fold_bias(b_in, b_fn, b_out, w_fn_res, w_out).reshape(1, Do)

    w_in_bf = w_in.astype(jnp.bfloat16)
    w_fn_bf = w_fn.astype(jnp.bfloat16)     # residual NOT folded in (added in f32)
    w_out_bf = w_out.astype(jnp.bfloat16)

    x2d = x.reshape(M, Do)
    tm_eff = _row_tile(M, tm)
    grid = (pl.cdiv(M, tm_eff),)

    out2d = pl.pallas_call(
        _fused_kernel,
        out_shape=jax.ShapeDtypeStruct((M, Do), x.dtype),
        grid_spec=pltpu.PrefetchScalarGridSpec(
            num_scalar_prefetch=0,
            grid=grid,
            in_specs=[
                pl.BlockSpec((tm_eff, Do), lambda i: (i, 0)),  # x rows
                pl.BlockSpec((Do, Di), lambda i: (0, 0)),      # W_in
                pl.BlockSpec((Di, Di), lambda i: (0, 0)),      # W_fn
                pl.BlockSpec((Di, Do), lambda i: (0, 0)),      # W_out
                pl.BlockSpec((1, Do), lambda i: (0, 0)),       # b_total
            ],
            out_specs=pl.BlockSpec((tm_eff, Do), lambda i: (i, 0)),
        ),
        compiler_params=_compiler_params(),
    )(x2d, w_in_bf, w_fn_bf, w_out_bf, b_total)

    return out2d.reshape(B, N, Do)


# --------------------------------------------------------------------------
# Reference + test harness
# --------------------------------------------------------------------------
def _reference(x, w_in, b_in, w_fn, b_fn, w_out, b_out):
    h = x @ w_in + b_in
    y = (h @ w_fn + b_fn) + h
    return y @ w_out + b_out


def _init_linear(kw, kb, fan_in, fan_out):
    # PyTorch-Linear-like uniform init, weights stored pre-transposed [in, out].
    bound = 1.0 / np.sqrt(fan_in)
    w = jax.random.uniform(kw, (fan_in, fan_out), jnp.float32, -bound, bound)
    b = jax.random.uniform(kb, (fan_out,), jnp.float32, -bound, bound)
    return w, b


def _run_case(key, B, N, dim_outer, dim_inner):
    kx, k1, k2, k3, k4, k5, k6 = jax.random.split(key, 7)
    x = jax.random.normal(kx, (B, N, dim_outer), dtype=jnp.float32)
    w_in, b_in = _init_linear(k1, k2, dim_outer, dim_inner)    # project_in
    w_fn, b_fn = _init_linear(k3, k4, dim_inner, dim_inner)    # fn (inner Linear)
    w_out, b_out = _init_linear(k5, k6, dim_inner, dim_outer)  # project_out

    ref = _reference(x, w_in, b_in, w_fn, b_fn, w_out, b_out)

    for impl in (project_in_out, project_in_out_fused):
        out = impl(x, w_in, b_in, w_fn, b_fn, w_out, b_out)
        out = jax.block_until_ready(out)
        # bf16 MXU operands (f32 accumulation) -> loosened tolerance vs f32 ref.
        np.testing.assert_allclose(np.asarray(out), np.asarray(ref),
                                   rtol=3e-2, atol=3e-2)


if __name__ == "__main__":
    key = jax.random.PRNGKey(0)
    k_small, k_big = jax.random.split(key)

    # Canonical small case (B=2, seq=8, dim_outer=32, dim_inner=64).
    _run_case(k_small, B=2, N=8, dim_outer=32, dim_inner=64)

    # Larger case exercising multi-step grid + partial trailing row block.
    _run_case(k_big, B=3, N=100, dim_outer=48, dim_inner=80)

    print("KERNEL_OK")
</pallas_src>

<mosaic_0001>
module attributes {stable_mosaic.version = 11 : i64} {
  func.func @_affine_kernel(%arg0: i32, %arg1: memref<8x32xf32, #tpu.memory_space<vmem>>, %arg2: memref<32x32xbf16, #tpu.memory_space<vmem>>, %arg3: memref<1x32xf32, #tpu.memory_space<vmem>>, %arg4: memref<8x32xf32, #tpu.memory_space<vmem>>) attributes {dimension_semantics = [#tpu.dimension_semantics<parallel>], iteration_bounds = array<i64: 2>, scalar_prefetch = 0 : i64, scratch_operands = 0 : i64, tpu.core_type = #tpu.core_type<tc>, window_params = [{transform_indices = @transform_0, window_bounds = array<i64: 8, 32>}, {pipeline_mode = #tpu.pipeline_mode<synchronous>, transform_indices = @transform_1, window_bounds = array<i64: 32, 32>}, {pipeline_mode = #tpu.pipeline_mode<synchronous>, transform_indices = @transform_2, window_bounds = array<i64: 1, 32>}, {transform_indices = @transform_3, window_bounds = array<i64: 8, 32>}]} {
    %c0 = arith.constant 0 : index
    %c0_0 = arith.constant 0 : index
    %0 = vector.load %arg1[%c0, %c0_0] : memref<8x32xf32, #tpu.memory_space<vmem>>, vector<8x32xf32>
    %1 = arith.truncf %0 : vector<8x32xf32> to vector<8x32xbf16>
    %c0_1 = arith.constant 0 : index
    %c0_2 = arith.constant 0 : index
    %2 = vector.load %arg2[%c0_1, %c0_2] : memref<32x32xbf16, #tpu.memory_space<vmem>>, vector<32x32xbf16>
    %cst = arith.constant dense<0.000000e+00> : vector<8x32xf32>
    %3 = tpu.matmul %1, %2, %cst {dimension_numbers = #tpu.dot_dimension_numbers<[1], [0], [0], [1], [0, 0, 1, 1], [], []>} : vector<8x32xbf16>, vector<32x32xbf16>, vector<8x32xf32> -> vector<8x32xf32>
    %c0_3 = arith.constant 0 : index
    %c0_4 = arith.constant 0 : index
    %4 = vector.load %arg3[%c0_3, %c0_4] : memref<1x32xf32, #tpu.memory_space<vmem>>, vector<1x32xf32>
    %5 = vector.broadcast %4 : vector<1x32xf32> to vector<8x32xf32>
    %6 = arith.addf %3, %5 : vector<8x32xf32>
    %c0_5 = arith.constant 0 : index
    %c0_6 = arith.constant 0 : index
    %7 = vector.load %arg4[%c0_5, %c0_6] : memref<8x32xf32, #tpu.memory_space<vmem>>, vector<8x32xf32>
    tpu.vector_store %arg4[%c0_5, %c0_6], %6 {strides = array<i32>} : memref<8x32xf32, #tpu.memory_space<vmem>>, vector<8x32xf32>,
    return
  }
  func.func @transform_0(%arg0: i32) -> (i32, i32) {
    %c0_i32 = arith.constant 0 : i32
    %c0_i32_0 = arith.constant 0 : i32
    return %arg0, %c0_i32 : i32, i32
  }
  func.func @transform_1(%arg0: i32) -> (i32, i32) {
    %c0_i32 = arith.constant 0 : i32
    %c0_i32_0 = arith.constant 0 : i32
    %c0_i32_1 = arith.constant 0 : i32
    return %c0_i32, %c0_i32_0 : i32, i32
  }
  func.func @transform_2(%arg0: i32) -> (i32, i32) {
    %c0_i32 = arith.constant 0 : i32
    %c0_i32_0 = arith.constant 0 : i32
    %c0_i32_1 = arith.constant 0 : i32
    return %c0_i32, %c0_i32_0 : i32, i32
  }
  func.func @transform_3(%arg0: i32) -> (i32, i32) {
    %c0_i32 = arith.constant 0 : i32
    %c0_i32_0 = arith.constant 0 : i32
    return %arg0, %c0_i32 : i32, i32
  }
}

</mosaic_0001>

<llo_original>
// kernel: project_in_out.1
$region0: #{project_in_out.1}
  #allocation0 [shape = 'u32[]', space=smem, size = 0x4, offset = 0x4, fixed_abs, tag = 'smem constant byte address 0x4 - core index']
  #allocation1 [shape = 'u32[144,128]{1,0:T(1,128)}', space=vmem, size = 0x12000, scoped, tag = 'internal scratch']
  %s0 = inlined_call_operand.vmem [shape: f32[16,32], index: 0, kind: input, shape index: {}]
  %s1 = inlined_call_operand.vmem [shape: bf16[32,32], index: 1, kind: input, shape index: {}]
  %s2 = inlined_call_operand.vmem [shape: f32[1,32], index: 2, kind: input, shape index: {}]
  %s3 = inlined_call_operand.hbm [shape: f32[16,32], index: 3, kind: output, shape index: {}]
  %s4 = sld [smem:[#allocation0]]
  $region45: #{project_in_out.1} parent=0
    _
  %s6 = ssub.s32 1, %s4
  %s7 = scalar_select 0, %s6, %s4
  $region1: #{project_in_out.1} parent=0
    #allocation2 [shape = 'u8[8192]{0}', space=vmem, size = 0x2000, scoped, tag = 'output window, operand 0']
    #allocation3 [shape = 's32[2]{0}', space=sflag, size = 0x8, scoped, tag = 'scoped memory for project_in_out.1']
    %8 = vsyncpa [#allocation3], 0
    %s9 = scalar_lea.sflag [#allocation3], 1
    %10 = vsyncpa %s9, 0
    loop: start=0, step=1, limit=4
    $region2: #{project_in_out.1} parent=1 // loop_pre_header
      _
    $region3: #{project_in_out.1} parent=1 // loop_header
      %s12 = sphi 0, %s16
      %p13 = scmp.ge.s32.totalorder %s12, 4
      %s22 = sphi 0, %s24
      %s25 = sphi 0, %s22
      %s26 = sphi 0, %s25
      %s42 = sphi 0, %s26
      %s46 = sphi 0, %s46
      %s48 = sphi 0, %s46
      %s49 = sphi 0, %s48
      %s63 = sphi 0, %s49
      %s67 = sphi 0, %s67
      %s69 = sphi 0, %s67
      %s70 = sphi 0, %s69
      %s84 = sphi 0, %s70
      %s90 = sphi 0, %s92
      %s93 = sphi 0, %s90
      %s94 = sphi 0, %s93
      %s110 = sphi 0, %s94
    $region4: #{project_in_out.1} parent=1 // loop_header_branch
      %15 = sbr.rel (%p13) target = $region8
    $region5: #{project_in_out.1} parent=1 // loop_body
      %s17 = ssub.s32 %s12, 1
      %s18 = ssub.s32 %s12, 2
      %s19 = sadd.s32 %s12, 1
      %s20 = ssub.s32 %s12, %s19
      %p21 = scmp.eq.s32.totalorder %s20, 0
      %s23 = sadd.s32 %s22, 1
      %s24 = scalar_select %p21, %s22, %s23
      %p27 = pneg %p21
      %p28 = scmp.eq.s32.totalorder %s12, 1
      %p29 = por %p27, %p28
      %p30 = scmp.ne.s32.totalorder %s22, %s25
      %p31 = scmp.eq.s32.totalorder %s12, 0
      %p32 = por %p30, %p31
      %p33 = scmp.ne.s32.totalorder %s22, %s25
      %p34 = scmp.eq.s32.totalorder %s17, 1
      %p35 = por %p33, %p34
      %p36 = scmp.ne.s32.totalorder %s25, %s26
      %p37 = scmp.eq.s32.totalorder %s17, 0
      %p38 = por %p36, %p37
      %p39 = scmp.ne.s32.totalorder %s25, %s26
      %p40 = scmp.eq.s32.totalorder %s18, 1
      %p41 = por %p39, %p40
      %p43 = scmp.ne.s32.totalorder %s26, %s42
      %p44 = scmp.eq.s32.totalorder %s18, 0
      %p45 = por %p43, %p44
      %s47 = sadd.s32 %s46, 1
      %p50 = scmp.eq.s32.totalorder %s12, 1
      %p51 = scmp.ne.s32.totalorder %s46, %s48
      %p52 = scmp.eq.s32.totalorder %s12, 0
      %p53 = por %p51, %p52
      %p54 = scmp.ne.s32.totalorder %s46, %s48
      %p55 = scmp.eq.s32.totalorder %s17, 1
      %p56 = por %p54, %p55
      %p57 = scmp.ne.s32.totalorder %s48, %s49
      %p58 = scmp.eq.s32.totalorder %s17, 0
      %p59 = por %p57, %p58
      %p60 = scmp.ne.s32.totalorder %s48, %s49
      %p61 = scmp.eq.s32.totalorder %s18, 1
      %p62 = por %p60, %p61
      %p64 = scmp.ne.s32.totalorder %s49, %s63
      %p65 = scmp.eq.s32.totalorder %s18, 0
      %p66 = por %p64, %p65
      %s68 = sadd.s32 %s67, 1
      %p71 = scmp.eq.s32.totalorder %s12, 1
      %p72 = scmp.ne.s32.totalorder %s67, %s69
      %p73 = scmp.eq.s32.totalorder %s12, 0
      %p74 = por %p72, %p73
      %p75 = scmp.ne.s32.totalorder %s67, %s69
      %p76 = scmp.eq.s32.totalorder %s17, 1
      %p77 = por %p75, %p76
      %p78 = scmp.ne.s32.totalorder %s69, %s70
      %p79 = scmp.eq.s32.totalorder %s17, 0
      %p80 = por %p78, %p79
      %p81 = scmp.ne.s32.totalorder %s69, %s70
      %p82 = scmp.eq.s32.totalorder %s18, 1
      %p83 = por %p81, %p82
      %p85 = scmp.ne.s32.totalorder %s70, %s84
      %p86 = scmp.eq.s32.totalorder %s18, 0
      %p87 = por %p85, %p86
      %s88 = ssub.s32 %s12, %s19
      %p89 = scmp.eq.s32.totalorder %s88, 0
      %s91 = sadd.s32 %s90, 1
      %s92 = scalar_select %p89, %s90, %s91
      %p95 = pneg %p89
      %p96 = scmp.eq.s32.totalorder %s12, 1
      %p97 = por %p95, %p96
      %p98 = scmp.ne.s32.totalorder %s90, %s93
      %p99 = scmp.eq.s32.totalorder %s12, 0
      %p100 = por %p98, %p99
      %p101 = scmp.ne.s32.totalorder %s90, %s93
      %p102 = scmp.eq.s32.totalorder %s17, 1
      %p103 = por %p101, %p102
      %p104 = scmp.ne.s32.totalorder %s93, %s94
      %p105 = scmp.eq.s32.totalorder %s17, 0
      %p106 = por %p104, %p105
      %p107 = scmp.ne.s32.totalorder %s93, %s94
      %p108 = scmp.eq.s32.totalorder %s18, 1
      %p109 = por %p107, %p108
      %p111 = scmp.ne.s32.totalorder %s94, %s110
      %p112 = scmp.eq.s32.totalorder %s18, 0
      %p113 = por %p111, %p112
      %p114 = scmp.le.s32.totalorder 1, %s12
      %p115 = scmp.lt.s32.totalorder %s12, 3
      %p116 = pnand %p114, %p115
      %p117 = pneg %p116
      // Predicated region
      $region9: #{project_in_out.1} parent=5 // pred_check
        _
      $region10: #{project_in_out.1} parent=5 // pred_check_branch
        %119 = sbr.rel (%p116) target = $region12
      $region11: #{project_in_out.1} parent=5 // pred_region
        %s120 = ssub.s32 %s12, 1
        // Predicated region
        $region13: #{project_in_out.1} parent=11 // pred_check
          %p121 = pneg %p59
        $region14: #{project_in_out.1} parent=11 // pred_check_branch
          %123 = sbr.rel (%p121) target = $region16
        $region15: #{project_in_out.1} parent=11 // pred_region
          _
        $region16: #{project_in_out.1} parent=11 // pred_fallthru
          _
        // Predicated region
        $region17: #{project_in_out.1} parent=11 // pred_check
          %p124 = pneg %p80
        $region18: #{project_in_out.1} parent=11 // pred_check_branch
          %126 = sbr.rel (%p124) target = $region20
        $region19: #{project_in_out.1} parent=11 // pred_region
          _
        $region20: #{project_in_out.1} parent=11 // pred_fallthru
          _
      $region12: #{project_in_out.1} parent=5 // pred_fallthru
        _
      %p127 = scmp.lt.s32.totalorder %s12, 2
      // Predicated region
      $region21: #{project_in_out.1} parent=5 // pred_check
        %p128 = pneg %p127
      $region22: #{project_in_out.1} parent=5 // pred_check_branch
        %130 = sbr.rel (%p128) target = $region24
      $region23: #{project_in_out.1} parent=5 // pred_region
        // Predicated region
        $region25: #{project_in_out.1} parent=23 // pred_check
          %p131 = pneg %p32
        $region26: #{project_in_out.1} parent=23 // pred_check_branch
          %133 = sbr.rel (%p131) target = $region28
        $region27: #{project_in_out.1} parent=23 // pred_region
          %p134 = scmp.lt.s32.totalorder %s12, 1
          %s135 = scalar_select %p134, %s12, 1
          %s136 = smul.addr %s135, 8
          %s137 = scalar_lea.vmem %s0, %s136
        $region28: #{project_in_out.1} parent=23 // pred_fallthru
          _
      $region24: #{project_in_out.1} parent=5 // pred_fallthru
        _
      %p138 = scmp.le.s32.totalorder 1, %s12
      %p139 = scmp.lt.s32.totalorder %s12, 3
      %p140 = pnand %p138, %p139
      %p141 = pneg %p140
      // Predicated region
      $region29: #{project_in_out.1} parent=5 // pred_check
        _
      $region30: #{project_in_out.1} parent=5 // pred_check_branch
        %143 = sbr.rel (%p140) target = $region32
      $region31: #{project_in_out.1} parent=5 // pred_region
        %s144 = ssub.s32 %s12, 1
        %p145 = scmp.lt.s32.totalorder %s17, 1
        %s146 = scalar_select %p145, %s17, 1
        %s147 = smul.addr %s146, 8
        %s148 = scalar_lea.vmem %s0, %s147
        %p149 = pneg %p38
        %p150 = pneg %p35
        %p151 = pneg %p59
        %p152 = pneg %p56
        %p153 = pneg %p80
        %p154 = pneg %p77
        %p155 = pneg %p106
        %p156 = pneg %p103
        %s157 = sand.u32 %s93, 1
        %s158 = scalar_lea.sflag [#allocation3], %s157
        %s159 = sand.u32 %s93, 1
        %s160 = smul.addr %s159, 8
        %s161 = scalar_lea.vmem [#allocation2], %s160
        %p162 = scmp.lt.s32.totalorder %s17, 1
        %s163 = scalar_select %p162, %s17, 1
        %s164 = smul.addr %s163, 8
        %s165 = scalar_lea.vmem %s0, %s164
        %v167 = vld [vmem:[%s165] sm:$0xff]
        %v168 = vpack.c.bf16 %v167, %v167
        %v169 = vld [vmem:[%s1] sm:$0xf]
        %v170 = vld [vmem:[%s1 + $0x4] sm:$0xf]
        %v171 = vld [vmem:[%s1 + $0x8] sm:$0xf]
        %v172 = vld [vmem:[%s1 + $0xc] sm:$0xf]
        %v173 = vld [vmem:[%s2] sm:$0x1]
        %v175 = vlaneseq
        %v176 = vshrl.u32 %v175, 7
        %v177 = vsub.s32 0, %v176
        %v178 = vrot.slane %v173, %v177
        %v184 = vunpack.c.l.b16 %v169
        %v185 = vunpack.c.l.b16 %v170
        %v186 = vunpack.c.l.b16 %v171
        %v187 = vunpack.c.l.b16 %v172
        %v188 = vpack.c.b16 %v185, %v184
        %v189 = vpack.c.b16 %v187, %v186
        %vm192 = vcmask 261120
        %v194 = vsel %vm192, %v168, 0
        %196 = vmatprep.subr.bf16.mxu0 0
        %197 = vmatpush1.bf16.msra.mxu0 %v188
        %198 = vmatprep.subr.bf16.mxu0 0
        %199 = vmatpush1.bf16.msra.mxu0 %v189
        %200 = vmatprep.subr.bf16.mxu0 0
        %201 = vmatpush1.bf16.msra.mxu0 0
        %202 = vmatprep.subr.bf16.mxu0 0
        %203 = vmatpush1.bf16.msra.mxu0 0
        %204 = vmatprep.subr.bf16.mxu0 0
        %205 = vmatpush1.bf16.msra.mxu0 0
        %206 = vmatprep.subr.bf16.mxu0 0
        %207 = vmatpush1.bf16.msra.mxu0 0
        %208 = vmatprep.subr.bf16.mxu0 0
        %209 = vmatpush1.bf16.msra.mxu0 0
        %210 = vmatprep.subr.bf16.mxu0 0
        %211 = vmatpush1.bf16.msra.mxu0 0
        %212 = vmatprep.subr.bf16.mxu0 0
        %213 = vmatpush1.bf16.msra.mxu0 0
        %214 = vmatprep.subr.bf16.mxu0 0
        %215 = vmatpush1.bf16.msra.mxu0 0
        %216 = vmatprep.subr.bf16.mxu0 0
        %217 = vmatpush1.bf16.msra.mxu0 0
        %218 = vmatprep.subr.bf16.mxu0 0
        %219 = vmatpush1.bf16.msra.mxu0 0
        %220 = vmatprep.subr.bf16.mxu0 0
        %221 = vmatpush1.bf16.msra.mxu0 0
        %222 = vmatprep.subr.bf16.mxu0 0
        %223 = vmatpush1.bf16.msra.mxu0 0
        %224 = vmatprep.subr.bf16.mxu0 0
        %225 = vmatpush1.bf16.msra.mxu0 0
        %226 = vmatprep.subr.bf16.mxu0 0
        %227 = vmatpush1.bf16.msra.mxu0 0
        %228 = vmatprep.mubr.bf16.mxu0 0
        %229 = vmatmul.mubr.bf16.gmra.mrb[0].mxu0 %v194
        %v230 = vpop.f32.mrb[0].mxu0
        %v231 = vadd.f32 %v178, %v230
        %v232 = vpop.f32.mrb[0].mxu0
        %v233 = vpop.f32.mrb[0].mxu0
        %v234 = vpop.f32.mrb[0].mxu0
        %235 = vdwg.mxu0
        %236 = vst.msk [vmem:[%s161] sm:$0xff] %vm192, %v231
        %s237 = sand.u32 %s93, 1
        %s238 = scalar_lea.sflag [#allocation3], %s237
        %s239 = sand.u32 %s93, 1
        %s240 = smul.addr %s239, 8
        %s241 = scalar_lea.vmem [#allocation2], %s240
        // Predicated region
        $region33: #{project_in_out.1} parent=31 // pred_check
          %p242 = pneg %p103
        $region34: #{project_in_out.1} parent=31 // pred_check_branch
          %244 = sbr.rel (%p242) target = $region36
        $region35: #{project_in_out.1} parent=31 // pred_region
          %s246 = ssub.s32 128, 128
          %247 = vsyncadd %s238, %s246
          %s248 = smul.addr %s17, 128
          %s249 = scalar_lea.hbm %s3, %s248
          %s251 = sshll.u32 %s241, 4
          %s252 = int_to_ptr.vmem [resolvable:$true] %s251
          %254 = dma.vmem_to_hbm [thread:$0]  %s252, 128, %s249, %s238
        $region36: #{project_in_out.1} parent=31 // pred_fallthru
          _
      $region32: #{project_in_out.1} parent=5 // pred_fallthru
        _
      %p255 = scmp.le.s32.totalorder 2, %s12
      // Predicated region
      $region37: #{project_in_out.1} parent=5 // pred_check
        %p256 = pneg %p255
      $region38: #{project_in_out.1} parent=5 // pred_check_branch
        %258 = sbr.rel (%p256) target = $region40
      $region39: #{project_in_out.1} parent=5 // pred_region
        %s259 = ssub.s32 %s12, 2
        // Predicated region
        $region41: #{project_in_out.1} parent=39 // pred_check
          %p260 = pneg %p109
        $region42: #{project_in_out.1} parent=39 // pred_check_branch
          %262 = sbr.rel (%p260) target = $region44
        $region43: #{project_in_out.1} parent=39 // pred_region
          %s263 = sand.u32 %s94, 1
          %s264 = scalar_lea.sflag [#allocation3], %s263
          %s265 = sand.u32 %s94, 1
          %s266 = smul.addr %s265, 8
          %s267 = scalar_lea.vmem [#allocation2], %s266
          %268 = dma.done %s264, 128
        $region44: #{project_in_out.1} parent=39 // pred_fallthru
          _
      $region40: #{project_in_out.1} parent=5 // pred_fallthru
        _
    $region6: #{project_in_out.1} parent=1 // loop_footer
      %s16 = sadd.s32 1, %s12
    $region7: #{project_in_out.1} parent=1 // loop_footer_branch
      %11 = sbr.rel target = $region3
    $region8: #{project_in_out.1} parent=1 // loop_exit
      _
    %269 = vsyncpa [#allocation3], 1
    %s270 = scalar_lea.sflag [#allocation3], 1
    %271 = vsyncpa %s270, 1

</llo_original>
